<compile_context>
chip_gen: v6e
topology: v6e:2x2x1
jax: 0.10.0
libtpu: 0.0.40
codegen_flags: <defaults>
</compile_context>

<pallas_src>
import numpy as np
import jax
import jax.numpy as jnp
from jax.experimental import pallas as pl
from jax.experimental.pallas import tpu as pltpu


def _round_up(x, m):
    return ((x + m - 1) // m) * m


# ----------------------------- Pallas kernel --------------------------------
def _make_transition_kernel(W):
    """Kernel specialised for spatial width W (needed for static reshapes)."""
    Wh = W // 2

    def kernel(x_ref, scale_ref, shift_ref, w_ref, o_ref):
        # x_ref:     (Nb*H*W, Cin)   activation rows in (n, h, w) order, C in lanes
        # scale_ref: (1, Cin)        folded BN scale  (gamma / sqrt(var + eps))
        # shift_ref: (1, Cin)        folded BN shift  (beta - mean * scale)
        # w_ref:     (Cin, Opad)     1x1 conv weight, selection folded, O zero-padded, bf16
        # o_ref:     (Nb*HW4, Opad)  pooled conv output, f32, lane-dense
        nrows, cin = x_ref.shape
        half = nrows // 2                          # Nb * H * (W/2)
        scale = scale_ref[...]                     # (1, Cin)
        shift = shift_ref[...]

        # ---- BN + ReLU + 2x2 avg-pool, all on the VPU ----------------------
        # W-direction pairing: sublane-strided loads pick even / odd columns.
        xa = x_ref[pl.ds(0, half, 2), :]           # rows (n, h, 2*pw)
        xb = x_ref[pl.ds(1, half, 2), :]           # rows (n, h, 2*pw + 1)
        ra = jnp.maximum(xa * scale + shift, 0.0)  # BN + ReLU (each elem once)
        rb = jnp.maximum(xb * scale + shift, 0.0)
        rw = ra + rb                               # (Nb*H*Wh, Cin), rows (n, h, pw)

        # H-direction pairing: split rows into (even h, odd h) pairs (free reshape).
        r4 = rw.reshape(half // (2 * Wh), 2, Wh, cin)
        pooled = (r4[:, 0] + r4[:, 1]) * 0.25      # (Nb*H/2, Wh, Cin)
        pooled = pooled.reshape(half // 2, cin)    # (Nb*HW4, Cin)

        # ---- 1x1 conv as one MXU matmul (bf16 inputs, f32 accumulate) ------
        y = jnp.dot(pooled.astype(jnp.bfloat16), w_ref[...],
                    preferred_element_type=jnp.float32)   # (Nb*HW4, Opad)
        o_ref[...] = y.astype(o_ref.dtype)

    return kernel


def _pick_block_n(N, H, W, Cin, max_nb=8, vmem_budget_bytes=8 * 1024 * 1024):
    """Images per grid step: amortize per-step overhead, stay within a
    conservative VMEM budget (v7x has 64 MiB physical / 32 MiB default scoped),
    and keep >= 2 grid steps when possible so v7x's two TensorCores both work."""
    lanes = _round_up(max(Cin, 1), 128)
    per_img = 2 * H * W * lanes * 4           # double-buffered f32 input block
    cap = max(1, min(max_nb, vmem_budget_bytes // max(per_img, 1)))
    nb = 1
    for cand in range(min(N, cap), 0, -1):
        if N % cand == 0:
            nb = cand
            break
    while nb > 1 and N // nb < 2:
        cand = nb - 1
        while cand > 1 and N % cand != 0:
            cand -= 1
        nb = cand
    return nb


def transition_forward(x_nchw, gamma, beta, run_mean, run_var, sel_idx,
                       conv_w, eps=1e-5):
    """x_nchw: (N, Cin, H, W) f32.  Returns (N, O, H//2, W//2) f32."""
    N, Cin, H, W = x_nchw.shape
    O, Csel = conv_w.shape[0], conv_w.shape[1]
    assert H % 2 == 0 and W % 2 == 0, "avg_pool2d(2) with odd H/W not supported"
    # TODO(synk): training-mode BatchNorm (batch statistics) is not implemented.
    HW4 = (H // 2) * (W // 2)
    Opad = _round_up(O, 128)                  # lane-dense output stores

    # --- fold BN (inference) into per-channel scale/shift over ALL Cin ------
    scale = (gamma / jnp.sqrt(run_var + eps)).astype(jnp.float32)      # (Cin,)
    shift = (beta - run_mean * scale).astype(jnp.float32)              # (Cin,)
    scale = scale.reshape(1, Cin)
    shift = shift.reshape(1, Cin)

    # --- fold channel_selection into the conv weight (zero pruned rows),
    #     zero-pad output channels to a lane multiple, cast to bf16 ----------
    w_sel = conv_w.reshape(O, Csel).T.astype(jnp.float32)              # (Csel, O)
    w_rows = jnp.zeros((Cin, O), jnp.float32).at[sel_idx].set(w_sel)   # (Cin, O)
    w_full = jnp.pad(w_rows, ((0, 0), (0, Opad - O))).astype(jnp.bfloat16)

    # --- single layout pass: NCHW -> (N*H*W, Cin), channels in lanes --------
    x_rows = jnp.transpose(x_nchw, (0, 2, 3, 1)).reshape(N * H * W, Cin)

    Nb = _pick_block_n(N, H, W, Cin)
    grid = (N // Nb,)

    flops = 2 * N * HW4 * Cin * Opad + 5 * N * H * W * Cin
    bytes_accessed = (N * H * W * Cin * 4 + N * HW4 * Opad * 4
                      + Cin * Opad * 2 + 2 * Cin * 4)

    out_rows = pl.pallas_call(
        _make_transition_kernel(W),
        out_shape=jax.ShapeDtypeStruct((N * HW4, Opad), jnp.float32),
        grid=grid,
        in_specs=[
            pl.BlockSpec((Nb * H * W, Cin), lambda n: (n, 0)),
            pl.BlockSpec((1, Cin), lambda n: (0, 0)),
            pl.BlockSpec((1, Cin), lambda n: (0, 0)),
            pl.BlockSpec((Cin, Opad), lambda n: (0, 0)),
        ],
        out_specs=pl.BlockSpec((Nb * HW4, Opad), lambda n: (n, 0)),
        compiler_params=pltpu.CompilerParams(
            dimension_semantics=("parallel",),
            vmem_limit_bytes=32 * 1024 * 1024),
        cost_estimate=pl.CostEstimate(
            flops=flops, transcendentals=0, bytes_accessed=bytes_accessed),
    )(x_rows, scale, shift, w_full)

    # --- glue: drop lane padding, back to NCHW -------------------------------
    out = out_rows[:, :O].reshape(N, H // 2, W // 2, O)
    return jnp.transpose(out, (0, 3, 1, 2))   # (N, O, H//2, W//2)


# ----------------------------- pure-JAX reference ----------------------------
def transition_reference(x, gamma, beta, run_mean, run_var, sel_idx, conv_w,
                         eps=1e-5):
    N, Cin, H, W = x.shape
    O = conv_w.shape[0]
    xn = (x - run_mean[None, :, None, None]) / jnp.sqrt(
        run_var + eps)[None, :, None, None]
    xn = xn * gamma[None, :, None, None] + beta[None, :, None, None]
    xn = jnp.take(xn, sel_idx, axis=1)
    xn = jnp.maximum(xn, 0.0)
    y = jax.lax.conv_general_dilated(
        xn, conv_w, window_strides=(1, 1), padding="VALID",
        dimension_numbers=("NCHW", "OIHW", "NCHW"))
    y = y.reshape(N, O, H // 2, 2, W // 2, 2).mean(axis=(3, 5))
    return y


# ------------------------------------ main ------------------------------------
if __name__ == "__main__":
    # Small shapes consistent with the module.
    N, inplanes, H, W = 2, 8, 16, 16
    cfg, outplanes = 6, 4

    key = jax.random.PRNGKey(0)
    k0, k1, k2, k3, k4, k5 = jax.random.split(key, 6)

    x = jax.random.normal(k0, (N, inplanes, H, W), dtype=jnp.float32)

    # BatchNorm2d(inplanes) parameters + running stats (deterministic).
    gamma = jax.random.uniform(k1, (inplanes,), minval=0.5, maxval=1.5)
    beta = jax.random.normal(k2, (inplanes,)) * 0.1
    run_mean = jax.random.normal(k3, (inplanes,)) * 0.1
    run_var = jax.random.uniform(k4, (inplanes,), minval=0.5, maxval=1.5)

    # channel_selection(inplanes, cfg): deterministic subset of cfg channels.
    sel_idx = jnp.array([0, 2, 3, 5, 6, 7], dtype=jnp.int32)
    assert sel_idx.shape[0] == cfg

    # Conv2d(cfg, outplanes, kernel_size=1, bias=False) weight: (O, cfg, 1, 1).
    conv_w = jax.random.normal(k5, (outplanes, cfg, 1, 1), dtype=jnp.float32) \
             * (1.0 / np.sqrt(cfg))

    out = transition_forward(x, gamma, beta, run_mean, run_var, sel_idx, conv_w)
    out = jax.block_until_ready(out)

    ref = transition_reference(x, gamma, beta, run_mean, run_var, sel_idx, conv_w)
    ref = jax.block_until_ready(ref)

    assert out.shape == (N, outplanes, H // 2, W // 2), out.shape
    # Tolerance accounts for bf16 MXU inputs (f32 accumulation) in the kernel.
    np.testing.assert_allclose(np.asarray(out), np.asarray(ref),
                               rtol=2e-2, atol=2e-2)
    print("KERNEL_OK")
</pallas_src>

<mosaic_0001>
module attributes {stable_mosaic.version = 11 : i64} {
  func.func @kernel(%arg0: i32, %arg1: memref<256x8xf32, #tpu.memory_space<vmem>>, %arg2: memref<1x8xf32, #tpu.memory_space<vmem>>, %arg3: memref<1x8xf32, #tpu.memory_space<vmem>>, %arg4: memref<8x128xbf16, #tpu.memory_space<vmem>>, %arg5: memref<64x128xf32, #tpu.memory_space<vmem>>) attributes {dimension_semantics = [#tpu.dimension_semantics<parallel>], iteration_bounds = array<i64: 2>, scalar_prefetch = 0 : i64, scratch_operands = 0 : i64, tpu.core_type = #tpu.core_type<tc>, window_params = [{transform_indices = @transform_0, window_bounds = array<i64: 256, 8>}, {pipeline_mode = #tpu.pipeline_mode<synchronous>, transform_indices = @transform_1, window_bounds = array<i64: 1, 8>}, {pipeline_mode = #tpu.pipeline_mode<synchronous>, transform_indices = @transform_2, window_bounds = array<i64: 1, 8>}, {pipeline_mode = #tpu.pipeline_mode<synchronous>, transform_indices = @transform_3, window_bounds = array<i64: 8, 128>}, {transform_indices = @transform_4, window_bounds = array<i64: 64, 128>}]} {
    %c0 = arith.constant 0 : index
    %c0_0 = arith.constant 0 : index
    %0 = vector.load %arg2[%c0, %c0_0] : memref<1x8xf32, #tpu.memory_space<vmem>>, vector<1x8xf32>
    %c0_1 = arith.constant 0 : index
    %c0_2 = arith.constant 0 : index
    %1 = vector.load %arg3[%c0_1, %c0_2] : memref<1x8xf32, #tpu.memory_space<vmem>>, vector<1x8xf32>
    %c0_3 = arith.constant 0 : index
    %c0_4 = arith.constant 0 : index
    %2 = tpu.strided_load %arg1[%c0_3, %c0_4] {strides = array<i32: 2, 1>} : memref<256x8xf32, #tpu.memory_space<vmem>>, vector<128x8xf32>
    %c1 = arith.constant 1 : index
    %c0_5 = arith.constant 0 : index
    %3 = tpu.strided_load %arg1[%c1, %c0_5] {strides = array<i32: 2, 1>} : memref<256x8xf32, #tpu.memory_space<vmem>>, vector<128x8xf32>
    %4 = vector.broadcast %0 : vector<1x8xf32> to vector<128x8xf32>
    %5 = arith.mulf %2, %4 : vector<128x8xf32>
    %6 = vector.broadcast %1 : vector<1x8xf32> to vector<128x8xf32>
    %7 = arith.addf %5, %6 : vector<128x8xf32>
    %cst = arith.constant 0.000000e+00 : f32
    %8 = vector.broadcast %cst : f32 to vector<128x8xf32>
    %9 = arith.maximumf %7, %8 : vector<128x8xf32>
    %10 = vector.broadcast %0 : vector<1x8xf32> to vector<128x8xf32>
    %11 = arith.mulf %3, %10 : vector<128x8xf32>
    %12 = vector.broadcast %1 : vector<1x8xf32> to vector<128x8xf32>
    %13 = arith.addf %11, %12 : vector<128x8xf32>
    %cst_6 = arith.constant 0.000000e+00 : f32
    %14 = vector.broadcast %cst_6 : f32 to vector<128x8xf32>
    %15 = arith.maximumf %13, %14 : vector<128x8xf32>
    %16 = arith.addf %9, %15 : vector<128x8xf32>
    %17 = vector.shape_cast %16 : vector<128x8xf32> to vector<8x2x8x8xf32>
    %18 = vector.extract_strided_slice %17 {offsets = [0, 0, 0, 0], sizes = [8, 1, 8, 8], strides = [1, 1, 1, 1]} : vector<8x2x8x8xf32> to vector<8x1x8x8xf32>
    %19 = vector.shape_cast %18 : vector<8x1x8x8xf32> to vector<8x8x8xf32>
    %20 = vector.extract_strided_slice %17 {offsets = [0, 1, 0, 0], sizes = [8, 1, 8, 8], strides = [1, 1, 1, 1]} : vector<8x2x8x8xf32> to vector<8x1x8x8xf32>
    %21 = vector.shape_cast %20 : vector<8x1x8x8xf32> to vector<8x8x8xf32>
    %22 = arith.addf %19, %21 : vector<8x8x8xf32>
    %cst_7 = arith.constant 2.500000e-01 : f32
    %23 = vector.broadcast %cst_7 : f32 to vector<8x8x8xf32>
    %24 = arith.mulf %22, %23 : vector<8x8x8xf32>
    %25 = vector.shape_cast %24 : vector<8x8x8xf32> to vector<64x8xf32>
    %26 = arith.truncf %25 : vector<64x8xf32> to vector<64x8xbf16>
    %c0_8 = arith.constant 0 : index
    %c0_9 = arith.constant 0 : index
    %27 = vector.load %arg4[%c0_8, %c0_9] : memref<8x128xbf16, #tpu.memory_space<vmem>>, vector<8x128xbf16>
    %cst_10 = arith.constant dense<0.000000e+00> : vector<64x128xf32>
    %28 = tpu.matmul %26, %27, %cst_10 {dimension_numbers = #tpu.dot_dimension_numbers<[1], [0], [0], [1], [0, 0, 1, 1], [], []>} : vector<64x8xbf16>, vector<8x128xbf16>, vector<64x128xf32> -> vector<64x128xf32>
    %c0_11 = arith.constant 0 : index
    %c0_12 = arith.constant 0 : index
    %29 = vector.load %arg5[%c0_11, %c0_12] : memref<64x128xf32, #tpu.memory_space<vmem>>, vector<64x128xf32>
    tpu.vector_store %arg5[%c0_11, %c0_12], %28 {strides = array<i32>} : memref<64x128xf32, #tpu.memory_space<vmem>>, vector<64x128xf32>,
    return
  }
  func.func @transform_0(%arg0: i32) -> (i32, i32) {
    %c0_i32 = arith.constant 0 : i32
    %c0_i32_0 = arith.constant 0 : i32
    return %arg0, %c0_i32 : i32, i32
  }
  func.func @transform_1(%arg0: i32) -> (i32, i32) {
    %c0_i32 = arith.constant 0 : i32
    %c0_i32_0 = arith.constant 0 : i32
    %c0_i32_1 = arith.constant 0 : i32
    return %c0_i32, %c0_i32_0 : i32, i32
  }
  func.func @transform_2(%arg0: i32) -> (i32, i32) {
    %c0_i32 = arith.constant 0 : i32
    %c0_i32_0 = arith.constant 0 : i32
    %c0_i32_1 = arith.constant 0 : i32
    return %c0_i32, %c0_i32_0 : i32, i32
  }
  func.func @transform_3(%arg0: i32) -> (i32, i32) {
    %c0_i32 = arith.constant 0 : i32
    %c0_i32_0 = arith.constant 0 : i32
    %c0_i32_1 = arith.constant 0 : i32
    return %c0_i32, %c0_i32_0 : i32, i32
  }
  func.func @transform_4(%arg0: i32) -> (i32, i32) {
    %c0_i32 = arith.constant 0 : i32
    %c0_i32_0 = arith.constant 0 : i32
    return %arg0, %c0_i32 : i32, i32
  }
}

</mosaic_0001>

<llo_original>
// kernel: tpu_custom_call.1
$region0: #{tpu_custom_call.1}
  #allocation0 [shape = 'u32[]', space=smem, size = 0x4, offset = 0x4, fixed_abs, tag = 'smem constant byte address 0x4 - core index']
  #allocation1 [shape = 'u32[144,128]{1,0:T(1,128)}', space=vmem, size = 0x12000, scoped, tag = 'internal scratch']
  %s0 = inlined_call_operand.vmem [shape: f32[512,8], index: 0, kind: input, shape index: {}]
  %s1 = inlined_call_operand.vmem [shape: f32[1,8], index: 1, kind: input, shape index: {}]
  %s2 = inlined_call_operand.vmem [shape: f32[1,8], index: 2, kind: input, shape index: {}]
  %s3 = inlined_call_operand.vmem [shape: bf16[8,128], index: 3, kind: input, shape index: {}]
  %s4 = inlined_call_operand.hbm [shape: f32[128,128], index: 4, kind: output, shape index: {}]
  %s5 = sld [smem:[#allocation0]]
  $region49: #{tpu_custom_call.1} parent=0
    _
  %s7 = ssub.s32 1, %s5
  %s8 = scalar_select 0, %s7, %s5
  $region1: #{tpu_custom_call.1} parent=0
    #allocation2 [shape = 'u8[65536]{0}', space=vmem, size = 0x10000, scoped, tag = 'output window, operand 0']
    #allocation3 [shape = 's32[2]{0}', space=sflag, size = 0x8, scoped, tag = 'scoped memory for tpu_custom_call.1']
    %9 = vsyncpa [#allocation3], 0
    %s10 = scalar_lea.sflag [#allocation3], 1
    %11 = vsyncpa %s10, 0
    loop: start=0, step=1, limit=4
    $region2: #{tpu_custom_call.1} parent=1 // loop_pre_header
      _
    $region3: #{tpu_custom_call.1} parent=1 // loop_header
      %s13 = sphi 0, %s17
      %p14 = scmp.ge.s32.totalorder %s13, 4
      %s23 = sphi 0, %s25
      %s26 = sphi 0, %s23
      %s27 = sphi 0, %s26
      %s43 = sphi 0, %s27
      %s47 = sphi 0, %s47
      %s49 = sphi 0, %s47
      %s50 = sphi 0, %s49
      %s64 = sphi 0, %s50
      %s68 = sphi 0, %s68
      %s70 = sphi 0, %s68
      %s71 = sphi 0, %s70
      %s85 = sphi 0, %s71
      %s89 = sphi 0, %s89
      %s91 = sphi 0, %s89
      %s92 = sphi 0, %s91
      %s106 = sphi 0, %s92
      %s112 = sphi 0, %s114
      %s115 = sphi 0, %s112
      %s116 = sphi 0, %s115
      %s132 = sphi 0, %s116
    $region4: #{tpu_custom_call.1} parent=1 // loop_header_branch
      %16 = sbr.rel (%p14) target = $region8
    $region5: #{tpu_custom_call.1} parent=1 // loop_body
      %s18 = ssub.s32 %s13, 1
      %s19 = ssub.s32 %s13, 2
      %s20 = sadd.s32 %s13, 1
      %s21 = ssub.s32 %s13, %s20
      %p22 = scmp.eq.s32.totalorder %s21, 0
      %s24 = sadd.s32 %s23, 1
      %s25 = scalar_select %p22, %s23, %s24
      %p28 = pneg %p22
      %p29 = scmp.eq.s32.totalorder %s13, 1
      %p30 = por %p28, %p29
      %p31 = scmp.ne.s32.totalorder %s23, %s26
      %p32 = scmp.eq.s32.totalorder %s13, 0
      %p33 = por %p31, %p32
      %p34 = scmp.ne.s32.totalorder %s23, %s26
      %p35 = scmp.eq.s32.totalorder %s18, 1
      %p36 = por %p34, %p35
      %p37 = scmp.ne.s32.totalorder %s26, %s27
      %p38 = scmp.eq.s32.totalorder %s18, 0
      %p39 = por %p37, %p38
      %p40 = scmp.ne.s32.totalorder %s26, %s27
      %p41 = scmp.eq.s32.totalorder %s19, 1
      %p42 = por %p40, %p41
      %p44 = scmp.ne.s32.totalorder %s27, %s43
      %p45 = scmp.eq.s32.totalorder %s19, 0
      %p46 = por %p44, %p45
      %s48 = sadd.s32 %s47, 1
      %p51 = scmp.eq.s32.totalorder %s13, 1
      %p52 = scmp.ne.s32.totalorder %s47, %s49
      %p53 = scmp.eq.s32.totalorder %s13, 0
      %p54 = por %p52, %p53
      %p55 = scmp.ne.s32.totalorder %s47, %s49
      %p56 = scmp.eq.s32.totalorder %s18, 1
      %p57 = por %p55, %p56
      %p58 = scmp.ne.s32.totalorder %s49, %s50
      %p59 = scmp.eq.s32.totalorder %s18, 0
      %p60 = por %p58, %p59
      %p61 = scmp.ne.s32.totalorder %s49, %s50
      %p62 = scmp.eq.s32.totalorder %s19, 1
      %p63 = por %p61, %p62
      %p65 = scmp.ne.s32.totalorder %s50, %s64
      %p66 = scmp.eq.s32.totalorder %s19, 0
      %p67 = por %p65, %p66
      %s69 = sadd.s32 %s68, 1
      %p72 = scmp.eq.s32.totalorder %s13, 1
      %p73 = scmp.ne.s32.totalorder %s68, %s70
      %p74 = scmp.eq.s32.totalorder %s13, 0
      %p75 = por %p73, %p74
      %p76 = scmp.ne.s32.totalorder %s68, %s70
      %p77 = scmp.eq.s32.totalorder %s18, 1
      %p78 = por %p76, %p77
      %p79 = scmp.ne.s32.totalorder %s70, %s71
      %p80 = scmp.eq.s32.totalorder %s18, 0
      %p81 = por %p79, %p80
      %p82 = scmp.ne.s32.totalorder %s70, %s71
      %p83 = scmp.eq.s32.totalorder %s19, 1
      %p84 = por %p82, %p83
      %p86 = scmp.ne.s32.totalorder %s71, %s85
      %p87 = scmp.eq.s32.totalorder %s19, 0
      %p88 = por %p86, %p87
      %s90 = sadd.s32 %s89, 1
      %p93 = scmp.eq.s32.totalorder %s13, 1
      %p94 = scmp.ne.s32.totalorder %s89, %s91
      %p95 = scmp.eq.s32.totalorder %s13, 0
      %p96 = por %p94, %p95
      %p97 = scmp.ne.s32.totalorder %s89, %s91
      %p98 = scmp.eq.s32.totalorder %s18, 1
      %p99 = por %p97, %p98
      %p100 = scmp.ne.s32.totalorder %s91, %s92
      %p101 = scmp.eq.s32.totalorder %s18, 0
      %p102 = por %p100, %p101
      %p103 = scmp.ne.s32.totalorder %s91, %s92
      %p104 = scmp.eq.s32.totalorder %s19, 1
      %p105 = por %p103, %p104
      %p107 = scmp.ne.s32.totalorder %s92, %s106
      %p108 = scmp.eq.s32.totalorder %s19, 0
      %p109 = por %p107, %p108
      %s110 = ssub.s32 %s13, %s20
      %p111 = scmp.eq.s32.totalorder %s110, 0
      %s113 = sadd.s32 %s112, 1
      %s114 = scalar_select %p111, %s112, %s113
      %p117 = pneg %p111
      %p118 = scmp.eq.s32.totalorder %s13, 1
      %p119 = por %p117, %p118
      %p120 = scmp.ne.s32.totalorder %s112, %s115
      %p121 = scmp.eq.s32.totalorder %s13, 0
      %p122 = por %p120, %p121
      %p123 = scmp.ne.s32.totalorder %s112, %s115
      %p124 = scmp.eq.s32.totalorder %s18, 1
      %p125 = por %p123, %p124
      %p126 = scmp.ne.s32.totalorder %s115, %s116
      %p127 = scmp.eq.s32.totalorder %s18, 0
      %p128 = por %p126, %p127
      %p129 = scmp.ne.s32.totalorder %s115, %s116
      %p130 = scmp.eq.s32.totalorder %s19, 1
      %p131 = por %p129, %p130
      %p133 = scmp.ne.s32.totalorder %s116, %s132
      %p134 = scmp.eq.s32.totalorder %s19, 0
      %p135 = por %p133, %p134
      %p136 = scmp.le.s32.totalorder 1, %s13
      %p137 = scmp.lt.s32.totalorder %s13, 3
      %p138 = pnand %p136, %p137
      %p139 = pneg %p138
      // Predicated region
      $region9: #{tpu_custom_call.1} parent=5 // pred_check
        _
      $region10: #{tpu_custom_call.1} parent=5 // pred_check_branch
        %141 = sbr.rel (%p138) target = $region12
      $region11: #{tpu_custom_call.1} parent=5 // pred_region
        %s142 = ssub.s32 %s13, 1
        // Predicated region
        $region13: #{tpu_custom_call.1} parent=11 // pred_check
          %p143 = pneg %p60
        $region14: #{tpu_custom_call.1} parent=11 // pred_check_branch
          %145 = sbr.rel (%p143) target = $region16
        $region15: #{tpu_custom_call.1} parent=11 // pred_region
          _
        $region16: #{tpu_custom_call.1} parent=11 // pred_fallthru
          _
        // Predicated region
        $region17: #{tpu_custom_call.1} parent=11 // pred_check
          %p146 = pneg %p81
        $region18: #{tpu_custom_call.1} parent=11 // pred_check_branch
          %148 = sbr.rel (%p146) target = $region20
        $region19: #{tpu_custom_call.1} parent=11 // pred_region
          _
        $region20: #{tpu_custom_call.1} parent=11 // pred_fallthru
          _
        // Predicated region
        $region21: #{tpu_custom_call.1} parent=11 // pred_check
          %p149 = pneg %p102
        $region22: #{tpu_custom_call.1} parent=11 // pred_check_branch
          %151 = sbr.rel (%p149) target = $region24
        $region23: #{tpu_custom_call.1} parent=11 // pred_region
          _
        $region24: #{tpu_custom_call.1} parent=11 // pred_fallthru
          _
      $region12: #{tpu_custom_call.1} parent=5 // pred_fallthru
        _
      %p152 = scmp.lt.s32.totalorder %s13, 2
      // Predicated region
      $region25: #{tpu_custom_call.1} parent=5 // pred_check
        %p153 = pneg %p152
      $region26: #{tpu_custom_call.1} parent=5 // pred_check_branch
        %155 = sbr.rel (%p153) target = $region28
      $region27: #{tpu_custom_call.1} parent=5 // pred_region
        // Predicated region
        $region29: #{tpu_custom_call.1} parent=27 // pred_check
          %p156 = pneg %p33
        $region30: #{tpu_custom_call.1} parent=27 // pred_check_branch
          %158 = sbr.rel (%p156) target = $region32
        $region31: #{tpu_custom_call.1} parent=27 // pred_region
          %s159 = smul.u32 32, %s13
          %p160 = scmp.lt.s32.totalorder %s159, 63
          %s161 = scalar_select %p160, %s159, 63
          %s162 = smul.addr %s161, 8
          %s163 = scalar_lea.vmem %s0, %s162
          %s164 = smul.u32 32, %s13
        $region32: #{tpu_custom_call.1} parent=27 // pred_fallthru
          _
      $region28: #{tpu_custom_call.1} parent=5 // pred_fallthru
        _
      %p165 = scmp.le.s32.totalorder 1, %s13
      %p166 = scmp.lt.s32.totalorder %s13, 3
      %p167 = pnand %p165, %p166
      %p168 = pneg %p167
      // Predicated region
      $region33: #{tpu_custom_call.1} parent=5 // pred_check
        _
      $region34: #{tpu_custom_call.1} parent=5 // pred_check_branch
        %170 = sbr.rel (%p167) target = $region36
      $region35: #{tpu_custom_call.1} parent=5 // pred_region
        %s171 = ssub.s32 %s13, 1
        %s172 = smul.u32 32, %s18
        %p173 = scmp.lt.s32.totalorder %s172, 63
        %s174 = scalar_select %p173, %s172, 63
        %s175 = smul.addr %s174, 8
        %s176 = scalar_lea.vmem %s0, %s175
        %p177 = pneg %p39
        %p178 = pneg %p36
        %p179 = pneg %p60
        %p180 = pneg %p57
        %p181 = pneg %p81
        %p182 = pneg %p78
        %p183 = pneg %p102
        %p184 = pneg %p99
        %p185 = pneg %p128
        %p186 = pneg %p125
        %s187 = sand.u32 %s115, 1
        %s188 = scalar_lea.sflag [#allocation3], %s187
        %s189 = sand.u32 %s115, 1
        %s190 = smul.addr %s189, 64
        %s191 = scalar_lea.vmem [#allocation2], %s190
        %s192 = smul.u32 32, %s18
        %p193 = scmp.lt.s32.totalorder %s192, 63
        %s194 = scalar_select %p193, %s192, 63
        %s195 = smul.addr %s194, 8
        %s196 = scalar_lea.vmem %s0, %s195
        %s197 = smul.u32 32, %s18
        %s198 = smul.u32 8, %s18
        %v200 = vld [vmem:[%s1] sm:$0x1]
        %v201 = vld [vmem:[%s2] sm:$0x1]
        %v202 = vld [vmem:[%s196] ss:$2 sm:$0xff]
        %s203 = scalar_lea.vmem %s196, 16
        %v204 = vld [vmem:[%s203] ss:$2 sm:$0xff]
        %s205 = scalar_lea.vmem %s196, 32
        %v206 = vld [vmem:[%s205] ss:$2 sm:$0xff]
        %s207 = scalar_lea.vmem %s196, 48
        %v208 = vld [vmem:[%s207] ss:$2 sm:$0xff]
        %s209 = scalar_lea.vmem %s196, 64
        %v210 = vld [vmem:[%s209] ss:$2 sm:$0xff]
        %s211 = scalar_lea.vmem %s196, 80
        %v212 = vld [vmem:[%s211] ss:$2 sm:$0xff]
        %s213 = scalar_lea.vmem %s196, 96
        %v214 = vld [vmem:[%s213] ss:$2 sm:$0xff]
        %s215 = scalar_lea.vmem %s196, 112
        %v216 = vld [vmem:[%s215] ss:$2 sm:$0xff]
        %s217 = scalar_lea.vmem %s196, 128
        %v218 = vld [vmem:[%s217] ss:$2 sm:$0xff]
        %s219 = scalar_lea.vmem %s196, 144
        %v220 = vld [vmem:[%s219] ss:$2 sm:$0xff]
        %s221 = scalar_lea.vmem %s196, 160
        %v222 = vld [vmem:[%s221] ss:$2 sm:$0xff]
        %s223 = scalar_lea.vmem %s196, 176
        %v224 = vld [vmem:[%s223] ss:$2 sm:$0xff]
        %s225 = scalar_lea.vmem %s196, 192
        %v226 = vld [vmem:[%s225] ss:$2 sm:$0xff]
        %s227 = scalar_lea.vmem %s196, 208
        %v228 = vld [vmem:[%s227] ss:$2 sm:$0xff]
        %s229 = scalar_lea.vmem %s196, 224
        %v230 = vld [vmem:[%s229] ss:$2 sm:$0xff]
        %s231 = scalar_lea.vmem %s196, 240
        %v232 = vld [vmem:[%s231] ss:$2 sm:$0xff]
        %s233 = scalar_lea.vmem %s196, 1
        %v234 = vld [vmem:[%s233] ss:$2 sm:$0xff]
        %s235 = scalar_lea.vmem %s196, 17
        %v236 = vld [vmem:[%s235] ss:$2 sm:$0xff]
        %s237 = scalar_lea.vmem %s196, 33
        %v238 = vld [vmem:[%s237] ss:$2 sm:$0xff]
        %s239 = scalar_lea.vmem %s196, 49
        %v240 = vld [vmem:[%s239] ss:$2 sm:$0xff]
        %s241 = scalar_lea.vmem %s196, 65
        %v242 = vld [vmem:[%s241] ss:$2 sm:$0xff]
        %s243 = scalar_lea.vmem %s196, 81
        %v244 = vld [vmem:[%s243] ss:$2 sm:$0xff]
        %s245 = scalar_lea.vmem %s196, 97
        %v246 = vld [vmem:[%s245] ss:$2 sm:$0xff]
        %s247 = scalar_lea.vmem %s196, 113
        %v248 = vld [vmem:[%s247] ss:$2 sm:$0xff]
        %s249 = scalar_lea.vmem %s196, 129
        %v250 = vld [vmem:[%s249] ss:$2 sm:$0xff]
        %s251 = scalar_lea.vmem %s196, 145
        %v252 = vld [vmem:[%s251] ss:$2 sm:$0xff]
        %s253 = scalar_lea.vmem %s196, 161
        %v254 = vld [vmem:[%s253] ss:$2 sm:$0xff]
        %s255 = scalar_lea.vmem %s196, 177
        %v256 = vld [vmem:[%s255] ss:$2 sm:$0xff]
        %s257 = scalar_lea.vmem %s196, 193
        %v258 = vld [vmem:[%s257] ss:$2 sm:$0xff]
        %s259 = scalar_lea.vmem %s196, 209
        %v260 = vld [vmem:[%s259] ss:$2 sm:$0xff]
        %s261 = scalar_lea.vmem %s196, 225
        %v262 = vld [vmem:[%s261] ss:$2 sm:$0xff]
        %s263 = scalar_lea.vmem %s196, 241
        %v264 = vld [vmem:[%s263] ss:$2 sm:$0xff]
        %v266 = vlaneseq
        %v267 = vshrl.u32 %v266, 7
        %v268 = vsub.s32 0, %v267
        %v269 = vrot.slane %v200, %v268
        %v271 = vmul.f32 %v202, %v269
        %v272 = vmul.f32 %v204, %v269
        %v273 = vmul.f32 %v206, %v269
        %v274 = vmul.f32 %v208, %v269
        %v275 = vmul.f32 %v210, %v269
        %v276 = vmul.f32 %v212, %v269
        %v277 = vmul.f32 %v214, %v269
        %v278 = vmul.f32 %v216, %v269
        %v279 = vmul.f32 %v218, %v269
        %v280 = vmul.f32 %v220, %v269
        %v281 = vmul.f32 %v222, %v269
        %v282 = vmul.f32 %v224, %v269
        %v283 = vmul.f32 %v226, %v269
        %v284 = vmul.f32 %v228, %v269
        %v285 = vmul.f32 %v230, %v269
        %v286 = vmul.f32 %v232, %v269
        %v288 = vlaneseq
        %v289 = vshrl.u32 %v288, 7
        %v290 = vsub.s32 0, %v289
        %v291 = vrot.slane %v201, %v290
        %v293 = vadd.f32 %v271, %v291
        %v294 = vadd.f32 %v272, %v291
        %v295 = vadd.f32 %v273, %v291
        %v296 = vadd.f32 %v274, %v291
        %v297 = vadd.f32 %v275, %v291
        %v298 = vadd.f32 %v276, %v291
        %v299 = vadd.f32 %v277, %v291
        %v300 = vadd.f32 %v278, %v291
        %v301 = vadd.f32 %v279, %v291
        %v302 = vadd.f32 %v280, %v291
        %v303 = vadd.f32 %v281, %v291
        %v304 = vadd.f32 %v282, %v291
        %v305 = vadd.f32 %v283, %v291
        %v306 = vadd.f32 %v284, %v291
        %v307 = vadd.f32 %v285, %v291
        %v308 = vadd.f32 %v286, %v291
        %v309 = vmax.f32 %v293, 0.0
        %v310 = vmax.f32 %v294, 0.0
        %v311 = vmax.f32 %v295, 0.0
        %v312 = vmax.f32 %v296, 0.0
        %v313 = vmax.f32 %v297, 0.0
        %v314 = vmax.f32 %v298, 0.0
        %v315 = vmax.f32 %v299, 0.0
        %v316 = vmax.f32 %v300, 0.0
        %v317 = vmax.f32 %v301, 0.0
        %v318 = vmax.f32 %v302, 0.0
        %v319 = vmax.f32 %v303, 0.0
        %v320 = vmax.f32 %v304, 0.0
        %v321 = vmax.f32 %v305, 0.0
        %v322 = vmax.f32 %v306, 0.0
        %v323 = vmax.f32 %v307, 0.0
        %v324 = vmax.f32 %v308, 0.0
        %v325 = vmul.f32 %v234, %v269
        %v326 = vmul.f32 %v236, %v269
        %v327 = vmul.f32 %v238, %v269
        %v328 = vmul.f32 %v240, %v269
        %v329 = vmul.f32 %v242, %v269
        %v330 = vmul.f32 %v244, %v269
        %v331 = vmul.f32 %v246, %v269
        %v332 = vmul.f32 %v248, %v269
        %v333 = vmul.f32 %v250, %v269
        %v334 = vmul.f32 %v252, %v269
        %v335 = vmul.f32 %v254, %v269
        %v336 = vmul.f32 %v256, %v269
        %v337 = vmul.f32 %v258, %v269
        %v338 = vmul.f32 %v260, %v269
        %v339 = vmul.f32 %v262, %v269
        %v340 = vmul.f32 %v264, %v269
        %v341 = vadd.f32 %v325, %v291
        %v342 = vadd.f32 %v326, %v291
        %v343 = vadd.f32 %v327, %v291
        %v344 = vadd.f32 %v328, %v291
        %v345 = vadd.f32 %v329, %v291
        %v346 = vadd.f32 %v330, %v291
        %v347 = vadd.f32 %v331, %v291
        %v348 = vadd.f32 %v332, %v291
        %v349 = vadd.f32 %v333, %v291
        %v350 = vadd.f32 %v334, %v291
        %v351 = vadd.f32 %v335, %v291
        %v352 = vadd.f32 %v336, %v291
        %v353 = vadd.f32 %v337, %v291
        %v354 = vadd.f32 %v338, %v291
        %v355 = vadd.f32 %v339, %v291
        %v356 = vadd.f32 %v340, %v291
        %v357 = vmax.f32 %v341, 0.0
        %v358 = vmax.f32 %v342, 0.0
        %v359 = vmax.f32 %v343, 0.0
        %v360 = vmax.f32 %v344, 0.0
        %v361 = vmax.f32 %v345, 0.0
        %v362 = vmax.f32 %v346, 0.0
        %v363 = vmax.f32 %v347, 0.0
        %v364 = vmax.f32 %v348, 0.0
        %v365 = vmax.f32 %v349, 0.0
        %v366 = vmax.f32 %v350, 0.0
        %v367 = vmax.f32 %v351, 0.0
        %v368 = vmax.f32 %v352, 0.0
        %v369 = vmax.f32 %v353, 0.0
        %v370 = vmax.f32 %v354, 0.0
        %v371 = vmax.f32 %v355, 0.0
        %v372 = vmax.f32 %v356, 0.0
        %v373 = vadd.f32 %v309, %v357
        %v374 = vadd.f32 %v310, %v358
        %v375 = vadd.f32 %v311, %v359
        %v376 = vadd.f32 %v312, %v360
        %v377 = vadd.f32 %v313, %v361
        %v378 = vadd.f32 %v314, %v362
        %v379 = vadd.f32 %v315, %v363
        %v380 = vadd.f32 %v316, %v364
        %v381 = vadd.f32 %v317, %v365
        %v382 = vadd.f32 %v318, %v366
        %v383 = vadd.f32 %v319, %v367
        %v384 = vadd.f32 %v320, %v368
        %v385 = vadd.f32 %v321, %v369
        %v386 = vadd.f32 %v322, %v370
        %v387 = vadd.f32 %v323, %v371
        %v388 = vadd.f32 %v324, %v372
        %v389 = vadd.f32 %v373, %v374
        %v390 = vadd.f32 %v375, %v376
        %v391 = vadd.f32 %v377, %v378
        %v392 = vadd.f32 %v379, %v380
        %v393 = vadd.f32 %v381, %v382
        %v394 = vadd.f32 %v383, %v384
        %v395 = vadd.f32 %v385, %v386
        %v396 = vadd.f32 %v387, %v388
        %v397 = vmul.f32 %v389, 0.25
        %v398 = vmul.f32 %v390, 0.25
        %v399 = vmul.f32 %v391, 0.25
        %v400 = vmul.f32 %v392, 0.25
        %v401 = vmul.f32 %v393, 0.25
        %v402 = vmul.f32 %v394, 0.25
        %v403 = vmul.f32 %v395, 0.25
        %v404 = vmul.f32 %v396, 0.25
        %v405 = vpack.c.bf16 %v398, %v397
        %v406 = vpack.c.bf16 %v400, %v399
        %v407 = vpack.c.bf16 %v402, %v401
        %v408 = vpack.c.bf16 %v404, %v403
        %v409 = vld [vmem:[%s3] sm:$0xf]
        %vm410 = vcmask 64512
        %v412 = vsel %vm410, %v405, 0
        %v415 = vsel %vm410, %v406, 0
        %v418 = vsel %vm410, %v407, 0
        %v421 = vsel %vm410, %v408, 0
        %vm423 = vcmask 1043456
        %v425 = vsel %vm423, %v409, 0
        %427 = vmatprep.subr.bf16.mxu0 0
        %428 = vmatpush1.bf16.msra.mxu0 0
        %429 = vmatprep.subr.bf16.mxu0 0
        %430 = vmatpush1.bf16.msra.mxu0 0
        %431 = vmatprep.subr.bf16.mxu0 0
        %432 = vmatpush1.bf16.msra.mxu0 0
        %433 = vmatprep.subr.bf16.mxu0 0
        %434 = vmatpush1.bf16.msra.mxu0 0
        %435 = vmatprep.subr.bf16.mxu0 0
        %436 = vmatpush1.bf16.msra.mxu0 0
        %437 = vmatprep.subr.bf16.mxu0 0
        %438 = vmatpush1.bf16.msra.mxu0 0
        %439 = vmatprep.subr.bf16.mxu0 0
        %440 = vmatpush1.bf16.msra.mxu0 0
        %441 = vmatprep.subr.bf16.mxu0 0
        %442 = vmatpush1.bf16.msra.mxu0 %v425
        %443 = vmatprep.subr.bf16.mxu0 0
        %444 = vmatpush2.bf16.msra.mxu0 0
        %445 = vmatprep.subr.bf16.mxu0 0
        %446 = vmatpush2.bf16.msra.mxu0 0
        %447 = vmatprep.subr.bf16.mxu0 0
        %448 = vmatpush2.bf16.msra.mxu0 0
        %449 = vmatprep.subr.bf16.mxu0 0
        %450 = vmatpush2.bf16.msra.mxu0 0
        %451 = vmatprep.subr.bf16.mxu0 0
        %452 = vmatpush2.bf16.msra.mxu0 0
        %453 = vmatprep.subr.bf16.mxu0 0
        %454 = vmatpush2.bf16.msra.mxu0 0
        %455 = vmatprep.subr.bf16.mxu0 0
        %456 = vmatpush2.bf16.msra.mxu0 0
        %457 = vmatprep.subr.bf16.mxu0 0
        %458 = vmatpush2.bf16.msra.mxu0 0
        %459 = vmatprep.mubr.bf16.mxu0 0
        %460 = vmatmul.mubr.bf16.gmra.mxu0 %v412
        %v461 = vpop.f32.mrf.mxu0
        %v462 = vadd.f32 0.0, %v461
        %v463 = vpop.f32.mrf.mxu0
        %v464 = vpop.f32.mrf.mxu0
        %v465 = vadd.f32 0.0, %v464
        %v466 = vpop.f32.mrf.mxu0
        %467 = vmatprep.mubr.bf16.mxu0 0
        %468 = vmatmul.mubr.bf16.gmra.mxu0 %v415
        %v469 = vpop.f32.mrf.mxu0
        %v470 = vadd.f32 0.0, %v469
        %v471 = vpop.f32.mrf.mxu0
        %v472 = vpop.f32.mrf.mxu0
        %v473 = vadd.f32 0.0, %v472
        %v474 = vpop.f32.mrf.mxu0
        %475 = vmatprep.mubr.bf16.mxu0 0
        %476 = vmatmul.mubr.bf16.gmra.mxu0 %v418
        %v477 = vpop.f32.mrf.mxu0
        %v478 = vadd.f32 0.0, %v477
        %v479 = vpop.f32.mrf.mxu0
        %v480 = vpop.f32.mrf.mxu0
        %v481 = vadd.f32 0.0, %v480
        %v482 = vpop.f32.mrf.mxu0
        %483 = vmatprep.mubr.bf16.mxu0 0
        %484 = vmatmul.mubr.bf16.gmra.mxu0 %v421
        %v485 = vpop.f32.mrf.mxu0
        %v486 = vadd.f32 0.0, %v485
        %v487 = vpop.f32.mrf.mxu0
        %v488 = vpop.f32.mrf.mxu0
        %v489 = vadd.f32 0.0, %v488
        %v490 = vpop.f32.mrf.mxu0
        %491 = vdwg.mxu0
        %492 = vst [vmem:[%s191] sm:$0xff] %v462
        %493 = vst [vmem:[%s191 + $0x8] sm:$0xff] %v465
        %494 = vst [vmem:[%s191 + $0x10] sm:$0xff] %v470
        %495 = vst [vmem:[%s191 + $0x18] sm:$0xff] %v473
        %496 = vst [vmem:[%s191 + $0x20] sm:$0xff] %v478
        %497 = vst [vmem:[%s191 + $0x28] sm:$0xff] %v481
        %498 = vst [vmem:[%s191 + $0x30] sm:$0xff] %v486
        %499 = vst [vmem:[%s191 + $0x38] sm:$0xff] %v489
        %s500 = sand.u32 %s115, 1
        %s501 = scalar_lea.sflag [#allocation3], %s500
        %s502 = sand.u32 %s115, 1
        %s503 = smul.addr %s502, 64
        %s504 = scalar_lea.vmem [#allocation2], %s503
        // Predicated region
        $region37: #{tpu_custom_call.1} parent=35 // pred_check
          %p505 = pneg %p125
        $region38: #{tpu_custom_call.1} parent=35 // pred_check_branch
          %507 = sbr.rel (%p505) target = $region40
        $region39: #{tpu_custom_call.1} parent=35 // pred_region
          %s508 = smul.u32 8, %s18
          %s510 = ssub.s32 1024, 1024
          %511 = vsyncadd %s501, %s510
          %s512 = smul.addr %s508, 128
          %s513 = scalar_lea.hbm %s4, %s512
          %s514 = sshll.u32 %s504, 4
          %s515 = int_to_ptr.vmem [resolvable:$true] %s514
          %520 = dma.vmem_to_hbm [thread:$0]  %s515, 1024, %s513, %s501, 128, 128, 8
        $region40: #{tpu_custom_call.1} parent=35 // pred_fallthru
          _
      $region36: #{tpu_custom_call.1} parent=5 // pred_fallthru
        _
      %p521 = scmp.le.s32.totalorder 2, %s13
      // Predicated region
      $region41: #{tpu_custom_call.1} parent=5 // pred_check
        %p522 = pneg %p521
      $region42: #{tpu_custom_call.1} parent=5 // pred_check_branch
        %524 = sbr.rel (%p522) target = $region44
      $region43: #{tpu_custom_call.1} parent=5 // pred_region
        %s525 = ssub.s32 %s13, 2
        // Predicated region
        $region45: #{tpu_custom_call.1} parent=43 // pred_check
          %p526 = pneg %p131
        $region46: #{tpu_custom_call.1} parent=43 // pred_check_branch
          %528 = sbr.rel (%p526) target = $region48
        $region47: #{tpu_custom_call.1} parent=43 // pred_region
          %s529 = sand.u32 %s116, 1
          %s530 = scalar_lea.sflag [#allocation3], %s529
          %s531 = sand.u32 %s116, 1
          %s532 = smul.addr %s531, 64
          %s533 = scalar_lea.vmem [#allocation2], %s532
          %534 = dma.done %s530, 1024
        $region48: #{tpu_custom_call.1} parent=43 // pred_fallthru
          _
      $region44: #{tpu_custom_call.1} parent=5 // pred_fallthru
        _
    $region6: #{tpu_custom_call.1} parent=1 // loop_footer
      %s17 = sadd.s32 1, %s13
    $region7: #{tpu_custom_call.1} parent=1 // loop_footer_branch
      %12 = sbr.rel target = $region3
    $region8: #{tpu_custom_call.1} parent=1 // loop_exit
      _
    %535 = vsyncpa [#allocation3], 1
    %s536 = scalar_lea.sflag [#allocation3], 1
    %537 = vsyncpa %s536, 1

</llo_original>
